<compile_context>
chip_gen: v5e
topology: v5e:2x2
jax: 0.10.0
libtpu: 0.0.40
codegen_flags: <defaults>
</compile_context>

<pallas_src>
import math

import jax
import jax.numpy as jnp
from jax.experimental import pallas as pl
from jax.experimental.pallas import tpu as pltpu


def _round_up(x, m):
    return ((x + m - 1) // m) * m


def _pad2(a, rows, cols):
    pr, pc = rows - a.shape[0], cols - a.shape[1]
    if pr == 0 and pc == 0:
        return a
    return jnp.pad(a, ((0, pr), (0, pc)))


def _pick_tb(batch):
    """Batch tile: multiple of 16 (bf16 sublane pack); as large as possible
    without blowing up pure-padding rows (avoids the old `TB=128 if B>128`
    up-to-2x padding trap)."""
    if batch <= 16:
        return 16
    for tb in (512, 256, 128, 64, 32, 16):
        if _round_up(batch, tb) - batch <= max(batch // 4, 15):
            return tb
    return 16


def _pick_tk(d_in, hp, cp, *, tb_budget=512, budget_bytes=40 << 20):
    """K tile for streaming x / w1, sized so the whole pipeline stays well
    under v7x's 64 MiB per-TC VMEM (and v5e/v6e scoped limits)."""
    d_aligned = _round_up(d_in, 128)
    resident = (hp * hp * 2 + hp * cp * 2          # w2 / w3c, single-buffered bf16
                + 8 * (2 * hp + cp) * 4            # biases (f32, sublane-padded)
                + tb_budget * hp * 4               # f32 accumulator scratch
                + 2 * tb_budget * cp * 4)          # double-buffered f32 out tile
    for tk in (16384, 8192, 4096, 2048, 1024, 512, 256, 128):
        if tk > d_aligned:
            continue
        streamed = 2 * (tb_budget * tk * 4 + tk * hp * 2)   # x(f32)+w1(bf16), 2 bufs
        if resident + streamed <= budget_bytes:
            return tk
    return 128


def _erm_forward_kernel(x_ref, w1_ref, b1_ref, w2_ref, b2_ref,
                        w3c_ref, b3c_ref, out_ref, acc_ref):
    """grid = (batch tiles, K tiles).

    x:    [TB, TK]  (f32, cast to bf16 in-kernel)
    w1:   [TK, Hp]  (bf16, streamed over K)       b1:  [1, Hp]  (f32)
    w2:   [Hp, Hp]  (bf16, resident)              b2:  [1, Hp]  (f32)
    w3c:  [Hp, Cp]  (bf16, folded layer3+clf)     b3c: [1, Cp]  (f32)
    out:  [TB, Cp]  (f32, lane-dense)
    acc:  [TB, Hp]  f32 VMEM accumulator scratch.
    """
    k = pl.program_id(1)

    @pl.when(k == 0)
    def _():
        acc_ref[...] = jnp.zeros_like(acc_ref)

    # bf16 cast on the VPU right before the MXU; no bf16 copy of x in HBM.
    x = x_ref[...].astype(jnp.bfloat16)
    acc_ref[...] += jnp.dot(x, w1_ref[...], preferred_element_type=jnp.float32)

    @pl.when(k == pl.num_programs(1) - 1)
    def _():
        h = jnp.maximum(acc_ref[...] + b1_ref[...], 0.0)      # f32 VPU math
        h = jnp.dot(h.astype(jnp.bfloat16), w2_ref[...],
                    preferred_element_type=jnp.float32)
        h = jnp.maximum(h + b2_ref[...], 0.0)
        logits = jnp.dot(h.astype(jnp.bfloat16), w3c_ref[...],
                         preferred_element_type=jnp.float32) + b3c_ref[...]
        out_ref[...] = logits.astype(out_ref.dtype)


def prepare_params(params, d_in):
    """Static per-model preparation (hoisted off the per-call path):
    fold layer3 + classifier, pad to lane/tile multiples, cast to bf16."""
    w1, b1, w2, b2, w3, b3, wc, bc = params
    H = w1.shape[1]
    C = wc.shape[1]
    Hp = _round_up(H, 128)
    Cp = _round_up(C, 128)
    TK = _pick_tk(d_in, Hp, Cp)
    Dp = _round_up(d_in, TK)

    # Fold layer 3 + classifier (no activation in between -> exact up to
    # float re-association): one fewer MXU pass per forward.
    w3c = w3 @ wc                        # [H, C]
    b3c = b3 @ wc + bc                   # [1, C]

    return dict(
        d_in=d_in, num_classes=C, Dp=Dp, Hp=Hp, Cp=Cp, TK=TK,
        w1=_pad2(w1, Dp, Hp).astype(jnp.bfloat16),
        w2=_pad2(w2, Hp, Hp).astype(jnp.bfloat16),
        w3c=_pad2(w3c, Hp, Cp).astype(jnp.bfloat16),
        b1=_pad2(b1.astype(jnp.float32), 1, Hp),
        b2=_pad2(b2.astype(jnp.float32), 1, Hp),
        b3c=_pad2(b3c.astype(jnp.float32), 1, Cp),
    )


def algorithm_forward(x_nchw, prep):
    """Flatten NCHW input and run the fused, K-tiled Pallas forward."""
    B = x_nchw.shape[0]
    x_flat = x_nchw.reshape(B, -1).astype(jnp.float32)
    D = x_flat.shape[1]
    assert D == prep["d_in"], (D, prep["d_in"])
    Dp, Hp, Cp, TK = prep["Dp"], prep["Hp"], prep["Cp"], prep["TK"]
    C = prep["num_classes"]

    TB = _pick_tb(B)
    Bp = _round_up(B, TB)
    # TODO(synk): mask the ragged last batch tile instead of zero-padding rows.
    x_p = _pad2(x_flat, Bp, Dp)          # stays f32; bf16 cast happens in-kernel

    grid = (Bp // TB, Dp // TK)

    const = dict(pipeline_mode=pl.Buffered(1))   # single-buffer resident blocks
    in_specs = [
        pl.BlockSpec((TB, TK), lambda i, k: (i, k)),            # x: streamed
        pl.BlockSpec((TK, Hp), lambda i, k: (k, 0)),            # w1: streamed over K
        pl.BlockSpec((1, Hp), lambda i, k: (0, 0), **const),    # b1
        pl.BlockSpec((Hp, Hp), lambda i, k: (0, 0), **const),   # w2 (resident)
        pl.BlockSpec((1, Hp), lambda i, k: (0, 0), **const),    # b2
        pl.BlockSpec((Hp, Cp), lambda i, k: (0, 0), **const),   # w3c (resident)
        pl.BlockSpec((1, Cp), lambda i, k: (0, 0), **const),    # b3c
    ]
    out_spec = pl.BlockSpec((TB, Cp), lambda i, k: (i, 0))

    footprint = (
        2 * TB * TK * 4 + 2 * TK * Hp * 2          # x / w1, double-buffered
        + Hp * Hp * 2 + Hp * Cp * 2                # w2 / w3c, single-buffered
        + 8 * (2 * Hp + Cp) * 4                    # biases (sublane-padded)
        + TB * Hp * 4                              # accumulator scratch
        + 2 * TB * Cp * 4                          # out tiles, double-buffered
    )
    vmem_limit = min(int(footprint * 1.3) + (8 << 20), 100 << 20)

    flops = 2 * Bp * (Dp * Hp + Hp * Hp + Hp * Cp)
    bytes_accessed = (
        Bp * Dp * 4 + Dp * Hp * 2 + Hp * Hp * 2 + Hp * Cp * 2
        + (2 * Hp + Cp) * 4 + Bp * Cp * 4
    )

    out_padded = pl.pallas_call(
        _erm_forward_kernel,
        out_shape=jax.ShapeDtypeStruct((Bp, Cp), jnp.float32),
        grid=grid,
        in_specs=in_specs,
        out_specs=out_spec,
        scratch_shapes=[pltpu.VMEM((TB, Hp), jnp.float32)],
        compiler_params=pltpu.CompilerParams(
            dimension_semantics=("parallel", "arbitrary"),
            vmem_limit_bytes=vmem_limit),
        cost_estimate=pl.CostEstimate(
            flops=int(flops), transcendentals=0,
            bytes_accessed=int(bytes_accessed)),
    )(x_p, prep["w1"], prep["b1"], prep["w2"], prep["b2"],
      prep["w3c"], prep["b3c"])

    return out_padded[:B, :C]


def init_params(key, d_in, hidden, num_classes):
    """Deterministic synthetic parameter init (PyTorch-Linear-like scaling)."""
    ks = jax.random.split(key, 8)

    def lin(kw, kb, fan_in, fan_out):
        bound = 1.0 / math.sqrt(fan_in)
        w = jax.random.uniform(kw, (fan_in, fan_out), jnp.float32, -bound, bound)
        b = jax.random.uniform(kb, (1, fan_out), jnp.float32, -bound, bound)
        return w, b

    w1, b1 = lin(ks[0], ks[1], d_in, hidden)
    w2, b2 = lin(ks[2], ks[3], hidden, hidden)
    w3, b3 = lin(ks[4], ks[5], hidden, hidden)
    wc, bc = lin(ks[6], ks[7], hidden, num_classes)
    return (w1, b1, w2, b2, w3, b3, wc, bc)


if __name__ == "__main__":
    # Small shapes consistent with an image-style DomainBed input.
    B, Cch, Him, Wim = 2, 4, 16, 16       # input_shape = (4, 16, 16)
    hidden = 32                            # mlp_width (small)
    num_classes = 7                        # e.g. PACS

    key = jax.random.PRNGKey(0)
    kx, kp = jax.random.split(key)
    x = jax.random.normal(kx, (B, Cch, Him, Wim), dtype=jnp.float32)
    params = init_params(kp, Cch * Him * Wim, hidden, num_classes)

    # Static weight prep is done ONCE, off the per-call forward path.
    prep = prepare_params(params, Cch * Him * Wim)

    out = algorithm_forward(x, prep)
    out = jax.block_until_ready(out)

    # Pure-JAX f32 reference of the un-folded forward pass.
    w1, b1, w2, b2, w3, b3, wc, bc = params
    xf = x.reshape(B, -1)
    h = jnp.maximum(xf @ w1 + b1, 0.0)
    h = jnp.maximum(h @ w2 + b2, 0.0)
    feat = h @ w3 + b3
    ref = feat @ wc + bc

    assert out.shape == (B, num_classes)
    # bf16 MXU inputs -> expect ~1e-2-level error vs the f32 reference.
    assert jnp.allclose(out, ref, atol=3e-2, rtol=3e-2), (
        float(jnp.max(jnp.abs(out - ref))))

    print("KERNEL_OK")
</pallas_src>

<mosaic_0001>
module attributes {stable_mosaic.version = 11 : i64} {
  func.func @_erm_forward_kernel(%arg0: i32, %arg1: i32, %arg2: memref<16x1024xf32, #tpu.memory_space<vmem>>, %arg3: memref<1024x128xbf16, #tpu.memory_space<vmem>>, %arg4: memref<1x128xf32, #tpu.memory_space<vmem>>, %arg5: memref<128x128xbf16, #tpu.memory_space<vmem>>, %arg6: memref<1x128xf32, #tpu.memory_space<vmem>>, %arg7: memref<128x128xbf16, #tpu.memory_space<vmem>>, %arg8: memref<1x128xf32, #tpu.memory_space<vmem>>, %arg9: memref<16x128xf32, #tpu.memory_space<vmem>>, %arg10: memref<16x128xf32, #tpu.memory_space<vmem>>) attributes {dimension_semantics = [#tpu.dimension_semantics<parallel>, #tpu.dimension_semantics<arbitrary>], iteration_bounds = array<i64: 1, 1>, scalar_prefetch = 0 : i64, scratch_operands = 1 : i64, tpu.core_type = #tpu.core_type<tc>, window_params = [{transform_indices = @transform_0, window_bounds = array<i64: 16, 1024>}, {transform_indices = @transform_1, window_bounds = array<i64: 1024, 128>}, {pipeline_mode = #tpu.pipeline_mode<synchronous>, transform_indices = @transform_2, window_bounds = array<i64: 1, 128>}, {pipeline_mode = #tpu.pipeline_mode<synchronous>, transform_indices = @transform_3, window_bounds = array<i64: 128, 128>}, {pipeline_mode = #tpu.pipeline_mode<synchronous>, transform_indices = @transform_4, window_bounds = array<i64: 1, 128>}, {pipeline_mode = #tpu.pipeline_mode<synchronous>, transform_indices = @transform_5, window_bounds = array<i64: 128, 128>}, {pipeline_mode = #tpu.pipeline_mode<synchronous>, transform_indices = @transform_6, window_bounds = array<i64: 1, 128>}, {transform_indices = @transform_7, window_bounds = array<i64: 16, 128>}]} {
    %c0_i32 = arith.constant 0 : i32
    %0 = arith.cmpi eq, %arg1, %c0_i32 : i32
    %1 = arith.extui %0 : i1 to i32
    %c0_i32_0 = arith.constant 0 : i32
    %2 = arith.cmpi ne, %1, %c0_i32_0 : i32
    scf.if %2 {
      %cst_10 = arith.constant 0.000000e+00 : f32
      %13 = vector.broadcast %cst_10 : f32 to vector<16x128xf32>
      %c0_11 = arith.constant 0 : index
      %c0_12 = arith.constant 0 : index
      %14 = vector.load %arg10[%c0_11, %c0_12] : memref<16x128xf32, #tpu.memory_space<vmem>>, vector<16x128xf32>
      tpu.vector_store %arg10[%c0_11, %c0_12], %13 {strides = array<i32>} : memref<16x128xf32, #tpu.memory_space<vmem>>, vector<16x128xf32>,
    } else {
    }
    %c0 = arith.constant 0 : index
    %c0_1 = arith.constant 0 : index
    %3 = vector.load %arg2[%c0, %c0_1] : memref<16x1024xf32, #tpu.memory_space<vmem>>, vector<16x1024xf32>
    %4 = arith.truncf %3 : vector<16x1024xf32> to vector<16x1024xbf16>
    %c0_2 = arith.constant 0 : index
    %c0_3 = arith.constant 0 : index
    %5 = vector.load %arg10[%c0_2, %c0_3] : memref<16x128xf32, #tpu.memory_space<vmem>>, vector<16x128xf32>
    %c0_4 = arith.constant 0 : index
    %c0_5 = arith.constant 0 : index
    %6 = vector.load %arg3[%c0_4, %c0_5] : memref<1024x128xbf16, #tpu.memory_space<vmem>>, vector<1024x128xbf16>
    %cst = arith.constant dense<0.000000e+00> : vector<16x128xf32>
    %7 = tpu.matmul %4, %6, %cst {dimension_numbers = #tpu.dot_dimension_numbers<[1], [0], [0], [1], [0, 0, 1, 1], [], []>} : vector<16x1024xbf16>, vector<1024x128xbf16>, vector<16x128xf32> -> vector<16x128xf32>
    %8 = arith.addf %5, %7 : vector<16x128xf32>
    %c0_6 = arith.constant 0 : index
    %c0_7 = arith.constant 0 : index
    %9 = vector.load %arg10[%c0_6, %c0_7] : memref<16x128xf32, #tpu.memory_space<vmem>>, vector<16x128xf32>
    tpu.vector_store %arg10[%c0_6, %c0_7], %8 {strides = array<i32>} : memref<16x128xf32, #tpu.memory_space<vmem>>, vector<16x128xf32>,
    %c0_i32_8 = arith.constant 0 : i32
    %10 = arith.cmpi eq, %arg1, %c0_i32_8 : i32
    %11 = arith.extui %10 : i1 to i32
    %c0_i32_9 = arith.constant 0 : i32
    %12 = arith.cmpi ne, %11, %c0_i32_9 : i32
    scf.if %12 {
      %c0_10 = arith.constant 0 : index
      %c0_11 = arith.constant 0 : index
      %13 = vector.load %arg10[%c0_10, %c0_11] : memref<16x128xf32, #tpu.memory_space<vmem>>, vector<16x128xf32>
      %c0_12 = arith.constant 0 : index
      %c0_13 = arith.constant 0 : index
      %14 = vector.load %arg4[%c0_12, %c0_13] : memref<1x128xf32, #tpu.memory_space<vmem>>, vector<1x128xf32>
      %15 = vector.broadcast %14 : vector<1x128xf32> to vector<16x128xf32>
      %16 = arith.addf %13, %15 : vector<16x128xf32>
      %cst_14 = arith.constant 0.000000e+00 : f32
      %17 = vector.broadcast %cst_14 : f32 to vector<16x128xf32>
      %18 = arith.maximumf %16, %17 : vector<16x128xf32>
      %19 = arith.truncf %18 : vector<16x128xf32> to vector<16x128xbf16>
      %c0_15 = arith.constant 0 : index
      %c0_16 = arith.constant 0 : index
      %20 = vector.load %arg5[%c0_15, %c0_16] : memref<128x128xbf16, #tpu.memory_space<vmem>>, vector<128x128xbf16>
      %cst_17 = arith.constant dense<0.000000e+00> : vector<16x128xf32>
      %21 = tpu.matmul %19, %20, %cst_17 {dimension_numbers = #tpu.dot_dimension_numbers<[1], [0], [0], [1], [0, 0, 1, 1], [], []>} : vector<16x128xbf16>, vector<128x128xbf16>, vector<16x128xf32> -> vector<16x128xf32>
      %c0_18 = arith.constant 0 : index
      %c0_19 = arith.constant 0 : index
      %22 = vector.load %arg6[%c0_18, %c0_19] : memref<1x128xf32, #tpu.memory_space<vmem>>, vector<1x128xf32>
      %23 = vector.broadcast %22 : vector<1x128xf32> to vector<16x128xf32>
      %24 = arith.addf %21, %23 : vector<16x128xf32>
      %cst_20 = arith.constant 0.000000e+00 : f32
      %25 = vector.broadcast %cst_20 : f32 to vector<16x128xf32>
      %26 = arith.maximumf %24, %25 : vector<16x128xf32>
      %27 = arith.truncf %26 : vector<16x128xf32> to vector<16x128xbf16>
      %c0_21 = arith.constant 0 : index
      %c0_22 = arith.constant 0 : index
      %28 = vector.load %arg7[%c0_21, %c0_22] : memref<128x128xbf16, #tpu.memory_space<vmem>>, vector<128x128xbf16>
      %cst_23 = arith.constant dense<0.000000e+00> : vector<16x128xf32>
      %29 = tpu.matmul %27, %28, %cst_23 {dimension_numbers = #tpu.dot_dimension_numbers<[1], [0], [0], [1], [0, 0, 1, 1], [], []>} : vector<16x128xbf16>, vector<128x128xbf16>, vector<16x128xf32> -> vector<16x128xf32>
      %c0_24 = arith.constant 0 : index
      %c0_25 = arith.constant 0 : index
      %30 = vector.load %arg8[%c0_24, %c0_25] : memref<1x128xf32, #tpu.memory_space<vmem>>, vector<1x128xf32>
      %31 = vector.broadcast %30 : vector<1x128xf32> to vector<16x128xf32>
      %32 = arith.addf %29, %31 : vector<16x128xf32>
      %c0_26 = arith.constant 0 : index
      %c0_27 = arith.constant 0 : index
      %33 = vector.load %arg9[%c0_26, %c0_27] : memref<16x128xf32, #tpu.memory_space<vmem>>, vector<16x128xf32>
      tpu.vector_store %arg9[%c0_26, %c0_27], %32 {strides = array<i32>} : memref<16x128xf32, #tpu.memory_space<vmem>>, vector<16x128xf32>,
    } else {
    }
    return
  }
  func.func @transform_0(%arg0: i32, %arg1: i32) -> (i32, i32) {
    %c0_i32 = arith.constant 0 : i32
    return %arg0, %arg1 : i32, i32
  }
  func.func @transform_1(%arg0: i32, %arg1: i32) -> (i32, i32) {
    %c0_i32 = arith.constant 0 : i32
    %c0_i32_0 = arith.constant 0 : i32
    return %arg1, %c0_i32 : i32, i32
  }
  func.func @transform_2(%arg0: i32, %arg1: i32) -> (i32, i32) {
    %c0_i32 = arith.constant 0 : i32
    %c0_i32_0 = arith.constant 0 : i32
    %c0_i32_1 = arith.constant 0 : i32
    return %c0_i32, %c0_i32_0 : i32, i32
  }
  func.func @transform_3(%arg0: i32, %arg1: i32) -> (i32, i32) {
    %c0_i32 = arith.constant 0 : i32
    %c0_i32_0 = arith.constant 0 : i32
    %c0_i32_1 = arith.constant 0 : i32
    return %c0_i32, %c0_i32_0 : i32, i32
  }
  func.func @transform_4(%arg0: i32, %arg1: i32) -> (i32, i32) {
    %c0_i32 = arith.constant 0 : i32
    %c0_i32_0 = arith.constant 0 : i32
    %c0_i32_1 = arith.constant 0 : i32
    return %c0_i32, %c0_i32_0 : i32, i32
  }
  func.func @transform_5(%arg0: i32, %arg1: i32) -> (i32, i32) {
    %c0_i32 = arith.constant 0 : i32
    %c0_i32_0 = arith.constant 0 : i32
    %c0_i32_1 = arith.constant 0 : i32
    return %c0_i32, %c0_i32_0 : i32, i32
  }
  func.func @transform_6(%arg0: i32, %arg1: i32) -> (i32, i32) {
    %c0_i32 = arith.constant 0 : i32
    %c0_i32_0 = arith.constant 0 : i32
    %c0_i32_1 = arith.constant 0 : i32
    return %c0_i32, %c0_i32_0 : i32, i32
  }
  func.func @transform_7(%arg0: i32, %arg1: i32) -> (i32, i32) {
    %c0_i32 = arith.constant 0 : i32
    %c0_i32_0 = arith.constant 0 : i32
    return %arg0, %c0_i32 : i32, i32
  }
}

</mosaic_0001>

<llo_original>
// kernel: tpu_custom_call.1
$region0: #{tpu_custom_call.1}
  #allocation0 [shape = 'u32[]', space=smem, size = 0x4, offset = 0x4, fixed_abs, tag = 'smem constant byte address 0x4 - core index']
  #allocation1 [shape = 'u32[72,128]{1,0:T(1,128)}', space=vmem, size = 0x9000, scoped, tag = 'internal scratch']
  #allocation2 [shape = 'f32[16,128]{1,0:T(8,128)}', space=vmem, size = 0x2000, scoped, tag = 'scratch operand']
  %s0 = inlined_call_operand.hbm [shape: f32[16,1024], index: 0, kind: input, shape index: {}]
  %s1 = inlined_call_operand.hbm [shape: bf16[1024,128], index: 1, kind: input, shape index: {}]
  %s2 = inlined_call_operand.vmem [shape: f32[1,128], index: 2, kind: input, shape index: {}]
  %s3 = inlined_call_operand.hbm [shape: bf16[128,128], index: 3, kind: input, shape index: {}]
  %s4 = inlined_call_operand.vmem [shape: f32[1,128], index: 4, kind: input, shape index: {}]
  %s5 = inlined_call_operand.hbm [shape: bf16[128,128], index: 5, kind: input, shape index: {}]
  %s6 = inlined_call_operand.vmem [shape: f32[1,128], index: 6, kind: input, shape index: {}]
  %s7 = inlined_call_operand.hbm [shape: f32[16,128], index: 7, kind: output, shape index: {}]
  %s8 = sld [smem:[#allocation0]]
  $region62: #{tpu_custom_call.1} parent=0
    _
  %s10 = ssub.s32 1, %s8
  %s11 = scalar_select 0, %s10, %s8
  $region1: #{tpu_custom_call.1} parent=0
    #allocation3 [shape = 'u8[65536]{0}', space=vmem, size = 0x10000, scoped, tag = 'input window, operand 0, single buffered']
    #allocation4 [shape = 's32[1]{0}', space=sflag, size = 0x4, scoped, tag = 'scoped memory for tpu_custom_call.1']
    #allocation5 [shape = 's32[1]{0}', space=sflag, size = 0x4, scoped, tag = 'scoped memory for tpu_custom_call.1']
    #allocation6 [shape = 'u8[262144]{0}', space=vmem, size = 0x40000, scoped, tag = 'input window, operand 1, single buffered']
    #allocation7 [shape = 's32[1]{0}', space=sflag, size = 0x4, scoped, tag = 'scoped memory for tpu_custom_call.1']
    #allocation8 [shape = 'u8[32768]{0}', space=vmem, size = 0x8000, scoped, tag = 'input window, operand 3, single buffered']
    #allocation9 [shape = 'u8[32768]{0}', space=vmem, size = 0x8000, scoped, tag = 'input window, operand 5, single buffered']
    #allocation10 [shape = 's32[1]{0}', space=sflag, size = 0x4, scoped, tag = 'scoped memory for tpu_custom_call.1']
    #allocation11 [shape = 'u8[8192]{0}', space=vmem, size = 0x2000, scoped, tag = 'output window, operand 0, single buffered']
    %12 = vsyncpa [#allocation4], 0
    %13 = vsyncpa [#allocation7], 0
    %14 = vsyncpa [#allocation10], 0
    %15 = vsyncpa [#allocation5], 0
    // Predicated region
    $region2: #{tpu_custom_call.1} parent=1 // pred_check
      _
    $region3: #{tpu_custom_call.1} parent=1 // pred_check_branch
      %17 = sbr.rel (0) target = $region5
    $region4: #{tpu_custom_call.1} parent=1 // pred_region
      %19 = vsyncadd [#allocation4], 0
      %s20 = sshll.u32 %s0, 4
      %s21 = int_to_ptr.hbm [resolvable:$true] %s20
      %s22 = sshll.u32 [#allocation3], 4
      %s23 = int_to_ptr.vmem [resolvable:$true] %s22
      %28 = dma.hbm_to_vmem [thread:$0]  %s21, 2048, %s23, [#allocation4], 1024, 1024, 64
    $region5: #{tpu_custom_call.1} parent=1 // pred_fallthru
      _
    // Predicated region
    $region6: #{tpu_custom_call.1} parent=1 // pred_check
      _
    $region7: #{tpu_custom_call.1} parent=1 // pred_check_branch
      %30 = sbr.rel (0) target = $region9
    $region8: #{tpu_custom_call.1} parent=1 // pred_region
      %32 = vsyncadd [#allocation7], 0
      %s33 = sshll.u32 %s1, 4
      %s34 = int_to_ptr.hbm [resolvable:$true] %s33
      %s35 = sshll.u32 [#allocation6], 4
      %s36 = int_to_ptr.vmem [resolvable:$true] %s35
      %41 = dma.hbm_to_vmem [thread:$0]  %s34, 8192, %s36, [#allocation7], 64, 64, 4
    $region9: #{tpu_custom_call.1} parent=1 // pred_fallthru
      _
    // Predicated region
    $region10: #{tpu_custom_call.1} parent=1 // pred_check
      _
    $region11: #{tpu_custom_call.1} parent=1 // pred_check_branch
      %43 = sbr.rel (0) target = $region13
    $region12: #{tpu_custom_call.1} parent=1 // pred_region
      _
    $region13: #{tpu_custom_call.1} parent=1 // pred_fallthru
      _
    // Predicated region
    $region14: #{tpu_custom_call.1} parent=1 // pred_check
      _
    $region15: #{tpu_custom_call.1} parent=1 // pred_check_branch
      %45 = sbr.rel (0) target = $region17
    $region16: #{tpu_custom_call.1} parent=1 // pred_region
      %47 = vsyncadd [#allocation7], 0
      %s48 = sshll.u32 %s3, 4
      %s49 = int_to_ptr.hbm [resolvable:$true] %s48
      %s50 = sshll.u32 [#allocation8], 4
      %s51 = int_to_ptr.vmem [resolvable:$true] %s50
      %56 = dma.hbm_to_vmem [thread:$0]  %s49, 1024, %s51, [#allocation7], 64, 64, 4
    $region17: #{tpu_custom_call.1} parent=1 // pred_fallthru
      _
    // Predicated region
    $region18: #{tpu_custom_call.1} parent=1 // pred_check
      _
    $region19: #{tpu_custom_call.1} parent=1 // pred_check_branch
      %58 = sbr.rel (0) target = $region21
    $region20: #{tpu_custom_call.1} parent=1 // pred_region
      _
    $region21: #{tpu_custom_call.1} parent=1 // pred_fallthru
      _
    // Predicated region
    $region22: #{tpu_custom_call.1} parent=1 // pred_check
      _
    $region23: #{tpu_custom_call.1} parent=1 // pred_check_branch
      %60 = sbr.rel (0) target = $region25
    $region24: #{tpu_custom_call.1} parent=1 // pred_region
      %62 = vsyncadd [#allocation10], 0
      %s63 = sshll.u32 %s5, 4
      %s64 = int_to_ptr.hbm [resolvable:$true] %s63
      %s65 = sshll.u32 [#allocation9], 4
      %s66 = int_to_ptr.vmem [resolvable:$true] %s65
      %71 = dma.hbm_to_vmem [thread:$0]  %s64, 1024, %s66, [#allocation10], 64, 64, 4
    $region25: #{tpu_custom_call.1} parent=1 // pred_fallthru
      _
    // Predicated region
    $region26: #{tpu_custom_call.1} parent=1 // pred_check
      _
    $region27: #{tpu_custom_call.1} parent=1 // pred_check_branch
      %73 = sbr.rel (0) target = $region29
    $region28: #{tpu_custom_call.1} parent=1 // pred_region
      _
    $region29: #{tpu_custom_call.1} parent=1 // pred_fallthru
      _
    // Predicated region
    $region30: #{tpu_custom_call.1} parent=1 // pred_check
      _
    $region31: #{tpu_custom_call.1} parent=1 // pred_check_branch
      %75 = sbr.rel (0) target = $region33
    $region32: #{tpu_custom_call.1} parent=1 // pred_region
      %77 = dma.done [#allocation4], 2048
    $region33: #{tpu_custom_call.1} parent=1 // pred_fallthru
      _
    // Predicated region
    $region34: #{tpu_custom_call.1} parent=1 // pred_check
      _
    $region35: #{tpu_custom_call.1} parent=1 // pred_check_branch
      %79 = sbr.rel (0) target = $region37
    $region36: #{tpu_custom_call.1} parent=1 // pred_region
      %81 = dma.done [#allocation7], 8192
    $region37: #{tpu_custom_call.1} parent=1 // pred_fallthru
      _
    // Predicated region
    $region38: #{tpu_custom_call.1} parent=1 // pred_check
      _
    $region39: #{tpu_custom_call.1} parent=1 // pred_check_branch
      %83 = sbr.rel (0) target = $region41
    $region40: #{tpu_custom_call.1} parent=1 // pred_region
      %85 = dma.done [#allocation7], 1024
    $region41: #{tpu_custom_call.1} parent=1 // pred_fallthru
      _
    // Predicated region
    $region42: #{tpu_custom_call.1} parent=1 // pred_check
      _
    $region43: #{tpu_custom_call.1} parent=1 // pred_check_branch
      %87 = sbr.rel (0) target = $region45
    $region44: #{tpu_custom_call.1} parent=1 // pred_region
      %89 = dma.done [#allocation10], 1024
    $region45: #{tpu_custom_call.1} parent=1 // pred_fallthru
      _
    %p90 = scmp.eq.s32.totalorder 0, 0
    // Predicated region
    $region46: #{tpu_custom_call.1} parent=1 // pred_check
      %p91 = pneg %p90
    $region47: #{tpu_custom_call.1} parent=1 // pred_check_branch
      %93 = sbr.rel (%p91) target = $region49
    $region48: #{tpu_custom_call.1} parent=1 // pred_region
      %94 = vst [vmem:[#allocation2] sm:$0xff] 0.0
      %95 = vst [vmem:[#allocation2 + $0x8] sm:$0xff] 0.0
    $region49: #{tpu_custom_call.1} parent=1 // pred_fallthru
      _
    %v96 = vld [vmem:[#allocation3] sm:$0xff]
    %v97 = vld [vmem:[#allocation3 + $0x8] sm:$0xff]
    %v98 = vld [vmem:[#allocation3 + $0x10] sm:$0xff]
    %v99 = vld [vmem:[#allocation3 + $0x18] sm:$0xff]
    %v100 = vld [vmem:[#allocation3 + $0x20] sm:$0xff]
    %v101 = vld [vmem:[#allocation3 + $0x28] sm:$0xff]
    %v102 = vld [vmem:[#allocation3 + $0x30] sm:$0xff]
    %v103 = vld [vmem:[#allocation3 + $0x38] sm:$0xff]
    %v104 = vld [vmem:[#allocation3 + $0x40] sm:$0xff]
    %v105 = vld [vmem:[#allocation3 + $0x48] sm:$0xff]
    %v106 = vld [vmem:[#allocation3 + $0x50] sm:$0xff]
    %v107 = vld [vmem:[#allocation3 + $0x58] sm:$0xff]
    %v108 = vld [vmem:[#allocation3 + $0x60] sm:$0xff]
    %v109 = vld [vmem:[#allocation3 + $0x68] sm:$0xff]
    %v110 = vld [vmem:[#allocation3 + $0x70] sm:$0xff]
    %v111 = vld [vmem:[#allocation3 + $0x78] sm:$0xff]
    %v112 = vpack.c.bf16 %v104, %v96
    %v113 = vpack.c.bf16 %v105, %v97
    %v114 = vpack.c.bf16 %v106, %v98
    %v115 = vpack.c.bf16 %v107, %v99
    %v116 = vpack.c.bf16 %v108, %v100
    %v117 = vpack.c.bf16 %v109, %v101
    %v118 = vpack.c.bf16 %v110, %v102
    %v119 = vpack.c.bf16 %v111, %v103
    %v120 = vld [vmem:[#allocation2] sm:$0xff]
    %v121 = vld [vmem:[#allocation2 + $0x8] sm:$0xff]
    %v122 = vld [vmem:[#allocation6] sm:$0xf]
    %v123 = vld [vmem:[#allocation6 + $0x4] sm:$0xf]
    %v124 = vld [vmem:[#allocation6 + $0x8] sm:$0xf]
    %v125 = vld [vmem:[#allocation6 + $0xc] sm:$0xf]
    %v126 = vld [vmem:[#allocation6 + $0x10] sm:$0xf]
    %v127 = vld [vmem:[#allocation6 + $0x14] sm:$0xf]
    %v128 = vld [vmem:[#allocation6 + $0x18] sm:$0xf]
    %v129 = vld [vmem:[#allocation6 + $0x1c] sm:$0xf]
    %v130 = vld [vmem:[#allocation6 + $0x20] sm:$0xf]
    %v131 = vld [vmem:[#allocation6 + $0x24] sm:$0xf]
    %v132 = vld [vmem:[#allocation6 + $0x28] sm:$0xf]
    %v133 = vld [vmem:[#allocation6 + $0x2c] sm:$0xf]
    %v134 = vld [vmem:[#allocation6 + $0x30] sm:$0xf]
    %v135 = vld [vmem:[#allocation6 + $0x34] sm:$0xf]
    %v136 = vld [vmem:[#allocation6 + $0x38] sm:$0xf]
    %v137 = vld [vmem:[#allocation6 + $0x3c] sm:$0xf]
    %v138 = vld [vmem:[#allocation6 + $0x40] sm:$0xf]
    %v139 = vld [vmem:[#allocation6 + $0x44] sm:$0xf]
    %v140 = vld [vmem:[#allocation6 + $0x48] sm:$0xf]
    %v141 = vld [vmem:[#allocation6 + $0x4c] sm:$0xf]
    %v142 = vld [vmem:[#allocation6 + $0x50] sm:$0xf]
    %v143 = vld [vmem:[#allocation6 + $0x54] sm:$0xf]
    %v144 = vld [vmem:[#allocation6 + $0x58] sm:$0xf]
    %v145 = vld [vmem:[#allocation6 + $0x5c] sm:$0xf]
    %v146 = vld [vmem:[#allocation6 + $0x60] sm:$0xf]
    %v147 = vld [vmem:[#allocation6 + $0x64] sm:$0xf]
    %v148 = vld [vmem:[#allocation6 + $0x68] sm:$0xf]
    %v149 = vld [vmem:[#allocation6 + $0x6c] sm:$0xf]
    %v150 = vld [vmem:[#allocation6 + $0x70] sm:$0xf]
    %v151 = vld [vmem:[#allocation6 + $0x74] sm:$0xf]
    %v152 = vld [vmem:[#allocation6 + $0x78] sm:$0xf]
    %v153 = vld [vmem:[#allocation6 + $0x7c] sm:$0xf]
    %v154 = vld [vmem:[#allocation6 + $0x80] sm:$0xf]
    %v155 = vld [vmem:[#allocation6 + $0x84] sm:$0xf]
    %v156 = vld [vmem:[#allocation6 + $0x88] sm:$0xf]
    %v157 = vld [vmem:[#allocation6 + $0x8c] sm:$0xf]
    %v158 = vld [vmem:[#allocation6 + $0x90] sm:$0xf]
    %v159 = vld [vmem:[#allocation6 + $0x94] sm:$0xf]
    %v160 = vld [vmem:[#allocation6 + $0x98] sm:$0xf]
    %v161 = vld [vmem:[#allocation6 + $0x9c] sm:$0xf]
    %v162 = vld [vmem:[#allocation6 + $0xa0] sm:$0xf]
    %v163 = vld [vmem:[#allocation6 + $0xa4] sm:$0xf]
    %v164 = vld [vmem:[#allocation6 + $0xa8] sm:$0xf]
    %v165 = vld [vmem:[#allocation6 + $0xac] sm:$0xf]
    %v166 = vld [vmem:[#allocation6 + $0xb0] sm:$0xf]
    %v167 = vld [vmem:[#allocation6 + $0xb4] sm:$0xf]
    %v168 = vld [vmem:[#allocation6 + $0xb8] sm:$0xf]
    %v169 = vld [vmem:[#allocation6 + $0xbc] sm:$0xf]
    %v170 = vld [vmem:[#allocation6 + $0xc0] sm:$0xf]
    %v171 = vld [vmem:[#allocation6 + $0xc4] sm:$0xf]
    %v172 = vld [vmem:[#allocation6 + $0xc8] sm:$0xf]
    %v173 = vld [vmem:[#allocation6 + $0xcc] sm:$0xf]
    %v174 = vld [vmem:[#allocation6 + $0xd0] sm:$0xf]
    %v175 = vld [vmem:[#allocation6 + $0xd4] sm:$0xf]
    %v176 = vld [vmem:[#allocation6 + $0xd8] sm:$0xf]
    %v177 = vld [vmem:[#allocation6 + $0xdc] sm:$0xf]
    %v178 = vld [vmem:[#allocation6 + $0xe0] sm:$0xf]
    %v179 = vld [vmem:[#allocation6 + $0xe4] sm:$0xf]
    %v180 = vld [vmem:[#allocation6 + $0xe8] sm:$0xf]
    %v181 = vld [vmem:[#allocation6 + $0xec] sm:$0xf]
    %v182 = vld [vmem:[#allocation6 + $0xf0] sm:$0xf]
    %v183 = vld [vmem:[#allocation6 + $0xf4] sm:$0xf]
    %v184 = vld [vmem:[#allocation6 + $0xf8] sm:$0xf]
    %v185 = vld [vmem:[#allocation6 + $0xfc] sm:$0xf]
    %v186 = vld [vmem:[#allocation6 + $0x100] sm:$0xf]
    %v187 = vld [vmem:[#allocation6 + $0x104] sm:$0xf]
    %v188 = vld [vmem:[#allocation6 + $0x108] sm:$0xf]
    %v189 = vld [vmem:[#allocation6 + $0x10c] sm:$0xf]
    %v190 = vld [vmem:[#allocation6 + $0x110] sm:$0xf]
    %v191 = vld [vmem:[#allocation6 + $0x114] sm:$0xf]
    %v192 = vld [vmem:[#allocation6 + $0x118] sm:$0xf]
    %v193 = vld [vmem:[#allocation6 + $0x11c] sm:$0xf]
    %v194 = vld [vmem:[#allocation6 + $0x120] sm:$0xf]
    %v195 = vld [vmem:[#allocation6 + $0x124] sm:$0xf]
    %v196 = vld [vmem:[#allocation6 + $0x128] sm:$0xf]
    %v197 = vld [vmem:[#allocation6 + $0x12c] sm:$0xf]
    %v198 = vld [vmem:[#allocation6 + $0x130] sm:$0xf]
    %v199 = vld [vmem:[#allocation6 + $0x134] sm:$0xf]
    %v200 = vld [vmem:[#allocation6 + $0x138] sm:$0xf]
    %v201 = vld [vmem:[#allocation6 + $0x13c] sm:$0xf]
    %v202 = vld [vmem:[#allocation6 + $0x140] sm:$0xf]
    %v203 = vld [vmem:[#allocation6 + $0x144] sm:$0xf]
    %v204 = vld [vmem:[#allocation6 + $0x148] sm:$0xf]
    %v205 = vld [vmem:[#allocation6 + $0x14c] sm:$0xf]
    %v206 = vld [vmem:[#allocation6 + $0x150] sm:$0xf]
    %v207 = vld [vmem:[#allocation6 + $0x154] sm:$0xf]
    %v208 = vld [vmem:[#allocation6 + $0x158] sm:$0xf]
    %v209 = vld [vmem:[#allocation6 + $0x15c] sm:$0xf]
    %v210 = vld [vmem:[#allocation6 + $0x160] sm:$0xf]
    %v211 = vld [vmem:[#allocation6 + $0x164] sm:$0xf]
    %v212 = vld [vmem:[#allocation6 + $0x168] sm:$0xf]
    %v213 = vld [vmem:[#allocation6 + $0x16c] sm:$0xf]
    %v214 = vld [vmem:[#allocation6 + $0x170] sm:$0xf]
    %v215 = vld [vmem:[#allocation6 + $0x174] sm:$0xf]
    %v216 = vld [vmem:[#allocation6 + $0x178] sm:$0xf]
    %v217 = vld [vmem:[#allocation6 + $0x17c] sm:$0xf]
    %v218 = vld [vmem:[#allocation6 + $0x180] sm:$0xf]
    %v219 = vld [vmem:[#allocation6 + $0x184] sm:$0xf]
    %v220 = vld [vmem:[#allocation6 + $0x188] sm:$0xf]
    %v221 = vld [vmem:[#allocation6 + $0x18c] sm:$0xf]
    %v222 = vld [vmem:[#allocation6 + $0x190] sm:$0xf]
    %v223 = vld [vmem:[#allocation6 + $0x194] sm:$0xf]
    %v224 = vld [vmem:[#allocation6 + $0x198] sm:$0xf]
    %v225 = vld [vmem:[#allocation6 + $0x19c] sm:$0xf]
    %v226 = vld [vmem:[#allocation6 + $0x1a0] sm:$0xf]
    %v227 = vld [vmem:[#allocation6 + $0x1a4] sm:$0xf]
    %v228 = vld [vmem:[#allocation6 + $0x1a8] sm:$0xf]
    %v229 = vld [vmem:[#allocation6 + $0x1ac] sm:$0xf]
    %v230 = vld [vmem:[#allocation6 + $0x1b0] sm:$0xf]
    %v231 = vld [vmem:[#allocation6 + $0x1b4] sm:$0xf]
    %v232 = vld [vmem:[#allocation6 + $0x1b8] sm:$0xf]
    %v233 = vld [vmem:[#allocation6 + $0x1bc] sm:$0xf]
    %v234 = vld [vmem:[#allocation6 + $0x1c0] sm:$0xf]
    %v235 = vld [vmem:[#allocation6 + $0x1c4] sm:$0xf]
    %v236 = vld [vmem:[#allocation6 + $0x1c8] sm:$0xf]
    %v237 = vld [vmem:[#allocation6 + $0x1cc] sm:$0xf]
    %v238 = vld [vmem:[#allocation6 + $0x1d0] sm:$0xf]
    %v239 = vld [vmem:[#allocation6 + $0x1d4] sm:$0xf]
    %v240 = vld [vmem:[#allocation6 + $0x1d8] sm:$0xf]
    %v241 = vld [vmem:[#allocation6 + $0x1dc] sm:$0xf]
    %v242 = vld [vmem:[#allocation6 + $0x1e0] sm:$0xf]
    %v243 = vld [vmem:[#allocation6 + $0x1e4] sm:$0xf]
    %v244 = vld [vmem:[#allocation6 + $0x1e8] sm:$0xf]
    %v245 = vld [vmem:[#allocation6 + $0x1ec] sm:$0xf]
    %v246 = vld [vmem:[#allocation6 + $0x1f0] sm:$0xf]
    %v247 = vld [vmem:[#allocation6 + $0x1f4] sm:$0xf]
    %v248 = vld [vmem:[#allocation6 + $0x1f8] sm:$0xf]
    %v249 = vld [vmem:[#allocation6 + $0x1fc] sm:$0xf]
    %v378 = vunpack.c.l.b16 %v122
    %v379 = vunpack.c.l.b16 %v123
    %v380 = vunpack.c.l.b16 %v124
    %v381 = vunpack.c.l.b16 %v125
    %v382 = vunpack.c.l.b16 %v126
    %v383 = vunpack.c.l.b16 %v127
    %v384 = vunpack.c.l.b16 %v128
    %v385 = vunpack.c.l.b16 %v129
    %v386 = vunpack.c.l.b16 %v130
    %v387 = vunpack.c.l.b16 %v131
    %v388 = vunpack.c.l.b16 %v132
    %v389 = vunpack.c.l.b16 %v133
    %v390 = vunpack.c.l.b16 %v134
    %v391 = vunpack.c.l.b16 %v135
    %v392 = vunpack.c.l.b16 %v136
    %v393 = vunpack.c.l.b16 %v137
    %v394 = vunpack.c.l.b16 %v138
    %v395 = vunpack.c.l.b16 %v139
    %v396 = vunpack.c.l.b16 %v140
    %v397 = vunpack.c.l.b16 %v141
    %v398 = vunpack.c.l.b16 %v142
    %v399 = vunpack.c.l.b16 %v143
    %v400 = vunpack.c.l.b16 %v144
    %v401 = vunpack.c.l.b16 %v145
    %v402 = vunpack.c.l.b16 %v146
    %v403 = vunpack.c.l.b16 %v147
    %v404 = vunpack.c.l.b16 %v148
    %v405 = vunpack.c.l.b16 %v149
    %v406 = vunpack.c.l.b16 %v150
    %v407 = vunpack.c.l.b16 %v151
    %v408 = vunpack.c.l.b16 %v152
    %v409 = vunpack.c.l.b16 %v153
    %v410 = vunpack.c.l.b16 %v154
    %v411 = vunpack.c.l.b16 %v155
    %v412 = vunpack.c.l.b16 %v156
    %v413 = vunpack.c.l.b16 %v157
    %v414 = vunpack.c.l.b16 %v158
    %v415 = vunpack.c.l.b16 %v159
    %v416 = vunpack.c.l.b16 %v160
    %v417 = vunpack.c.l.b16 %v161
    %v418 = vunpack.c.l.b16 %v162
    %v419 = vunpack.c.l.b16 %v163
    %v420 = vunpack.c.l.b16 %v164
    %v421 = vunpack.c.l.b16 %v165
    %v422 = vunpack.c.l.b16 %v166
    %v423 = vunpack.c.l.b16 %v167
    %v424 = vunpack.c.l.b16 %v168
    %v425 = vunpack.c.l.b16 %v169
    %v426 = vunpack.c.l.b16 %v170
    %v427 = vunpack.c.l.b16 %v171
    %v428 = vunpack.c.l.b16 %v172
    %v429 = vunpack.c.l.b16 %v173
    %v430 = vunpack.c.l.b16 %v174
    %v431 = vunpack.c.l.b16 %v175
    %v432 = vunpack.c.l.b16 %v176
    %v433 = vunpack.c.l.b16 %v177
    %v434 = vunpack.c.l.b16 %v178
    %v435 = vunpack.c.l.b16 %v179
    %v436 = vunpack.c.l.b16 %v180
    %v437 = vunpack.c.l.b16 %v181
    %v438 = vunpack.c.l.b16 %v182
    %v439 = vunpack.c.l.b16 %v183
    %v440 = vunpack.c.l.b16 %v184
    %v441 = vunpack.c.l.b16 %v185
    %v442 = vunpack.c.l.b16 %v186
    %v443 = vunpack.c.l.b16 %v187
    %v444 = vunpack.c.l.b16 %v188
    %v445 = vunpack.c.l.b16 %v189
    %v446 = vunpack.c.l.b16 %v190
    %v447 = vunpack.c.l.b16 %v191
    %v448 = vunpack.c.l.b16 %v192
    %v449 = vunpack.c.l.b16 %v193
    %v450 = vunpack.c.l.b16 %v194
    %v451 = vunpack.c.l.b16 %v195
    %v452 = vunpack.c.l.b16 %v196
    %v453 = vunpack.c.l.b16 %v197
    %v454 = vunpack.c.l.b16 %v198
    %v455 = vunpack.c.l.b16 %v199
    %v456 = vunpack.c.l.b16 %v200
    %v457 = vunpack.c.l.b16 %v201
    %v458 = vunpack.c.l.b16 %v202
    %v459 = vunpack.c.l.b16 %v203
    %v460 = vunpack.c.l.b16 %v204
    %v461 = vunpack.c.l.b16 %v205
    %v462 = vunpack.c.l.b16 %v206
    %v463 = vunpack.c.l.b16 %v207
    %v464 = vunpack.c.l.b16 %v208
    %v465 = vunpack.c.l.b16 %v209
    %v466 = vunpack.c.l.b16 %v210
    %v467 = vunpack.c.l.b16 %v211
    %v468 = vunpack.c.l.b16 %v212
    %v469 = vunpack.c.l.b16 %v213
    %v470 = vunpack.c.l.b16 %v214
    %v471 = vunpack.c.l.b16 %v215
    %v472 = vunpack.c.l.b16 %v216
    %v473 = vunpack.c.l.b16 %v217
    %v474 = vunpack.c.l.b16 %v218
    %v475 = vunpack.c.l.b16 %v219
    %v476 = vunpack.c.l.b16 %v220
    %v477 = vunpack.c.l.b16 %v221
    %v478 = vunpack.c.l.b16 %v222
    %v479 = vunpack.c.l.b16 %v223
    %v480 = vunpack.c.l.b16 %v224
    %v481 = vunpack.c.l.b16 %v225
    %v482 = vunpack.c.l.b16 %v226
    %v483 = vunpack.c.l.b16 %v227
    %v484 = vunpack.c.l.b16 %v228
    %v485 = vunpack.c.l.b16 %v229
    %v486 = vunpack.c.l.b16 %v230
    %v487 = vunpack.c.l.b16 %v231
    %v488 = vunpack.c.l.b16 %v232
    %v489 = vunpack.c.l.b16 %v233
    %v490 = vunpack.c.l.b16 %v234
    %v491 = vunpack.c.l.b16 %v235
    %v492 = vunpack.c.l.b16 %v236
    %v493 = vunpack.c.l.b16 %v237
    %v494 = vunpack.c.l.b16 %v238
    %v495 = vunpack.c.l.b16 %v239
    %v496 = vunpack.c.l.b16 %v240
    %v497 = vunpack.c.l.b16 %v241
    %v498 = vunpack.c.l.b16 %v242
    %v499 = vunpack.c.l.b16 %v243
    %v500 = vunpack.c.l.b16 %v244
    %v501 = vunpack.c.l.b16 %v245
    %v502 = vunpack.c.l.b16 %v246
    %v503 = vunpack.c.l.b16 %v247
    %v504 = vunpack.c.l.b16 %v248
    %v505 = vunpack.c.l.b16 %v249
    %v506 = vpack.c.b16 %v379, %v378
    %v507 = vpack.c.b16 %v381, %v380
    %v508 = vpack.c.b16 %v383, %v382
    %v509 = vpack.c.b16 %v385, %v384
    %v510 = vpack.c.b16 %v387, %v386
    %v511 = vpack.c.b16 %v389, %v388
    %v512 = vpack.c.b16 %v391, %v390
    %v513 = vpack.c.b16 %v393, %v392
    %v514 = vpack.c.b16 %v395, %v394
    %v515 = vpack.c.b16 %v397, %v396
    %v516 = vpack.c.b16 %v399, %v398
    %v517 = vpack.c.b16 %v401, %v400
    %v518 = vpack.c.b16 %v403, %v402
    %v519 = vpack.c.b16 %v405, %v404
    %v520 = vpack.c.b16 %v407, %v406
    %v521 = vpack.c.b16 %v409, %v408
    %v522 = vpack.c.b16 %v411, %v410
    %v523 = vpack.c.b16 %v413, %v412
    %v524 = vpack.c.b16 %v415, %v414
    %v525 = vpack.c.b16 %v417, %v416
    %v526 = vpack.c.b16 %v419, %v418
    %v527 = vpack.c.b16 %v421, %v420
    %v528 = vpack.c.b16 %v423, %v422
    %v529 = vpack.c.b16 %v425, %v424
    %v530 = vpack.c.b16 %v427, %v426
    %v531 = vpack.c.b16 %v429, %v428
    %v532 = vpack.c.b16 %v431, %v430
    %v533 = vpack.c.b16 %v433, %v432
    %v534 = vpack.c.b16 %v435, %v434
    %v535 = vpack.c.b16 %v437, %v436
    %v536 = vpack.c.b16 %v439, %v438
    %v537 = vpack.c.b16 %v441, %v440
    %v538 = vpack.c.b16 %v443, %v442
    %v539 = vpack.c.b16 %v445, %v444
    %v540 = vpack.c.b16 %v447, %v446
    %v541 = vpack.c.b16 %v449, %v448
    %v542 = vpack.c.b16 %v451, %v450
    %v543 = vpack.c.b16 %v453, %v452
    %v544 = vpack.c.b16 %v455, %v454
    %v545 = vpack.c.b16 %v457, %v456
    %v546 = vpack.c.b16 %v459, %v458
    %v547 = vpack.c.b16 %v461, %v460
    %v548 = vpack.c.b16 %v463, %v462
    %v549 = vpack.c.b16 %v465, %v464
    %v550 = vpack.c.b16 %v467, %v466
    %v551 = vpack.c.b16 %v469, %v468
    %v552 = vpack.c.b16 %v471, %v470
    %v553 = vpack.c.b16 %v473, %v472
    %v554 = vpack.c.b16 %v475, %v474
    %v555 = vpack.c.b16 %v477, %v476
    %v556 = vpack.c.b16 %v479, %v478
    %v557 = vpack.c.b16 %v481, %v480
    %v558 = vpack.c.b16 %v483, %v482
    %v559 = vpack.c.b16 %v485, %v484
    %v560 = vpack.c.b16 %v487, %v486
    %v561 = vpack.c.b16 %v489, %v488
    %v562 = vpack.c.b16 %v491, %v490
    %v563 = vpack.c.b16 %v493, %v492
    %v564 = vpack.c.b16 %v495, %v494
    %v565 = vpack.c.b16 %v497, %v496
    %v566 = vpack.c.b16 %v499, %v498
    %v567 = vpack.c.b16 %v501, %v500
    %v568 = vpack.c.b16 %v503, %v502
    %v569 = vpack.c.b16 %v505, %v504
    %634 = vmatpush.bf16.msra.mxu0 %v513
    %635 = vmatpush.bf16.msra.mxu0 %v512
    %636 = vmatpush.bf16.msra.mxu0 %v511
    %637 = vmatpush.bf16.msra.mxu0 %v510
    %638 = vmatpush.bf16.msra.mxu0 %v509
    %639 = vmatpush.bf16.msra.mxu0 %v508
    %640 = vmatpush.bf16.msra.mxu0 %v507
    %641 = vmatpush.bf16.msra.mxu0 %v506
    %642 = vmatmul.bf16.gmra.mxu0 %v112
    %v643 = vpop.f32.mrf.mxu0
    %v644 = vadd.f32 0.0, %v643
    %v645 = vpop.f32.mrf.mxu0
    %v646 = vadd.f32 0.0, %v645
    %647 = vdwg.mxu0
    %648 = vmatpush.bf16.msra.mxu0 %v521
    %649 = vmatpush.bf16.msra.mxu0 %v520
    %650 = vmatpush.bf16.msra.mxu0 %v519
    %651 = vmatpush.bf16.msra.mxu0 %v518
    %652 = vmatpush.bf16.msra.mxu0 %v517
    %653 = vmatpush.bf16.msra.mxu0 %v516
    %654 = vmatpush.bf16.msra.mxu0 %v515
    %655 = vmatpush.bf16.msra.mxu0 %v514
    %656 = vmatmul.bf16.gmra.mxu0 %v113
    %v657 = vpop.f32.mrf.mxu0
    %v658 = vadd.f32 %v644, %v657
    %v659 = vpop.f32.mrf.mxu0
    %v660 = vadd.f32 %v646, %v659
    %661 = vdwg.mxu0
    %662 = vmatpush.bf16.msra.mxu0 %v529
    %663 = vmatpush.bf16.msra.mxu0 %v528
    %664 = vmatpush.bf16.msra.mxu0 %v527
    %665 = vmatpush.bf16.msra.mxu0 %v526
    %666 = vmatpush.bf16.msra.mxu0 %v525
    %667 = vmatpush.bf16.msra.mxu0 %v524
    %668 = vmatpush.bf16.msra.mxu0 %v523
    %669 = vmatpush.bf16.msra.mxu0 %v522
    %670 = vmatmul.bf16.gmra.mxu0 %v114
    %v671 = vpop.f32.mrf.mxu0
    %v672 = vadd.f32 %v658, %v671
    %v673 = vpop.f32.mrf.mxu0
    %v674 = vadd.f32 %v660, %v673
    %675 = vdwg.mxu0
    %676 = vmatpush.bf16.msra.mxu0 %v537
    %677 = vmatpush.bf16.msra.mxu0 %v536
    %678 = vmatpush.bf16.msra.mxu0 %v535
    %679 = vmatpush.bf16.msra.mxu0 %v534
    %680 = vmatpush.bf16.msra.mxu0 %v533
    %681 = vmatpush.bf16.msra.mxu0 %v532
    %682 = vmatpush.bf16.msra.mxu0 %v531
    %683 = vmatpush.bf16.msra.mxu0 %v530
    %684 = vmatmul.bf16.gmra.mxu0 %v115
    %v685 = vpop.f32.mrf.mxu0
    %v686 = vadd.f32 %v672, %v685
    %v687 = vpop.f32.mrf.mxu0
    %v688 = vadd.f32 %v674, %v687
    %689 = vdwg.mxu0
    %690 = vmatpush.bf16.msra.mxu0 %v545
    %691 = vmatpush.bf16.msra.mxu0 %v544
    %692 = vmatpush.bf16.msra.mxu0 %v543
    %693 = vmatpush.bf16.msra.mxu0 %v542
    %694 = vmatpush.bf16.msra.mxu0 %v541
    %695 = vmatpush.bf16.msra.mxu0 %v540
    %696 = vmatpush.bf16.msra.mxu0 %v539
    %697 = vmatpush.bf16.msra.mxu0 %v538
    %698 = vmatmul.bf16.gmra.mxu0 %v116
    %v699 = vpop.f32.mrf.mxu0
    %v700 = vadd.f32 %v686, %v699
    %v701 = vpop.f32.mrf.mxu0
    %v702 = vadd.f32 %v688, %v701
    %703 = vdwg.mxu0
    %704 = vmatpush.bf16.msra.mxu0 %v553
    %705 = vmatpush.bf16.msra.mxu0 %v552
    %706 = vmatpush.bf16.msra.mxu0 %v551
    %707 = vmatpush.bf16.msra.mxu0 %v550
    %708 = vmatpush.bf16.msra.mxu0 %v549
    %709 = vmatpush.bf16.msra.mxu0 %v548
    %710 = vmatpush.bf16.msra.mxu0 %v547
    %711 = vmatpush.bf16.msra.mxu0 %v546
    %712 = vmatmul.bf16.gmra.mxu0 %v117
    %v713 = vpop.f32.mrf.mxu0
    %v714 = vadd.f32 %v700, %v713
    %v715 = vpop.f32.mrf.mxu0
    %v716 = vadd.f32 %v702, %v715
    %717 = vdwg.mxu0
    %718 = vmatpush.bf16.msra.mxu0 %v561
    %719 = vmatpush.bf16.msra.mxu0 %v560
    %720 = vmatpush.bf16.msra.mxu0 %v559
    %721 = vmatpush.bf16.msra.mxu0 %v558
    %722 = vmatpush.bf16.msra.mxu0 %v557
    %723 = vmatpush.bf16.msra.mxu0 %v556
    %724 = vmatpush.bf16.msra.mxu0 %v555
    %725 = vmatpush.bf16.msra.mxu0 %v554
    %726 = vmatmul.bf16.gmra.mxu0 %v118
    %v727 = vpop.f32.mrf.mxu0
    %v728 = vadd.f32 %v714, %v727
    %v729 = vpop.f32.mrf.mxu0
    %v730 = vadd.f32 %v716, %v729
    %731 = vdwg.mxu0
    %732 = vmatpush.bf16.msra.mxu0 %v569
    %733 = vmatpush.bf16.msra.mxu0 %v568
    %734 = vmatpush.bf16.msra.mxu0 %v567
    %735 = vmatpush.bf16.msra.mxu0 %v566
    %736 = vmatpush.bf16.msra.mxu0 %v565
    %737 = vmatpush.bf16.msra.mxu0 %v564
    %738 = vmatpush.bf16.msra.mxu0 %v563
    %739 = vmatpush.bf16.msra.mxu0 %v562
    %740 = vmatmul.bf16.gmra.mxu0 %v119
    %v741 = vpop.f32.mrf.mxu0
    %v742 = vadd.f32 %v728, %v741
    %v743 = vpop.f32.mrf.mxu0
    %v744 = vadd.f32 %v730, %v743
    %745 = vdwg.mxu0
    %v746 = vadd.f32 %v120, %v742
    %v747 = vadd.f32 %v121, %v744
    %748 = vst [vmem:[#allocation2] sm:$0xff] %v746
    %749 = vst [vmem:[#allocation2 + $0x8] sm:$0xff] %v747
    // Predicated region
    $region50: #{tpu_custom_call.1} parent=1 // pred_check
      %p750 = pneg %p90
    $region51: #{tpu_custom_call.1} parent=1 // pred_check_branch
      %752 = sbr.rel (%p750) target = $region53
    $region52: #{tpu_custom_call.1} parent=1 // pred_region
      %v753 = vld [vmem:[#allocation2] sm:$0xff]
      %v754 = vld [vmem:[#allocation2 + $0x8] sm:$0xff]
      %v755 = vld [vmem:[%s2] sm:$0x1]
      %v757 = vperm.slane %v755, 0
      %v759 = vadd.f32 %v753, %v757
      %v760 = vadd.f32 %v754, %v757
      %v761 = vmax.f32 %v759, 0.0
      %v762 = vmax.f32 %v760, 0.0
      %v763 = vpack.c.bf16 %v762, %v761
      %v764 = vld [vmem:[#allocation8] sm:$0xf]
      %v765 = vld [vmem:[#allocation8 + $0x4] sm:$0xf]
      %v766 = vld [vmem:[#allocation8 + $0x8] sm:$0xf]
      %v767 = vld [vmem:[#allocation8 + $0xc] sm:$0xf]
      %v768 = vld [vmem:[#allocation8 + $0x10] sm:$0xf]
      %v769 = vld [vmem:[#allocation8 + $0x14] sm:$0xf]
      %v770 = vld [vmem:[#allocation8 + $0x18] sm:$0xf]
      %v771 = vld [vmem:[#allocation8 + $0x1c] sm:$0xf]
      %v772 = vld [vmem:[#allocation8 + $0x20] sm:$0xf]
      %v773 = vld [vmem:[#allocation8 + $0x24] sm:$0xf]
      %v774 = vld [vmem:[#allocation8 + $0x28] sm:$0xf]
      %v775 = vld [vmem:[#allocation8 + $0x2c] sm:$0xf]
      %v776 = vld [vmem:[#allocation8 + $0x30] sm:$0xf]
      %v777 = vld [vmem:[#allocation8 + $0x34] sm:$0xf]
      %v778 = vld [vmem:[#allocation8 + $0x38] sm:$0xf]
      %v779 = vld [vmem:[#allocation8 + $0x3c] sm:$0xf]
      %v780 = vld [vmem:[%s4] sm:$0x1]
      %v782 = vperm.slane %v780, 0
      %v800 = vunpack.c.l.b16 %v764
      %v801 = vunpack.c.l.b16 %v765
      %v802 = vunpack.c.l.b16 %v766
      %v803 = vunpack.c.l.b16 %v767
      %v804 = vunpack.c.l.b16 %v768
      %v805 = vunpack.c.l.b16 %v769
      %v806 = vunpack.c.l.b16 %v770
      %v807 = vunpack.c.l.b16 %v771
      %v808 = vunpack.c.l.b16 %v772
      %v809 = vunpack.c.l.b16 %v773
      %v810 = vunpack.c.l.b16 %v774
      %v811 = vunpack.c.l.b16 %v775
      %v812 = vunpack.c.l.b16 %v776
      %v813 = vunpack.c.l.b16 %v777
      %v814 = vunpack.c.l.b16 %v778
      %v815 = vunpack.c.l.b16 %v779
      %v816 = vpack.c.b16 %v801, %v800
      %v817 = vpack.c.b16 %v803, %v802
      %v818 = vpack.c.b16 %v805, %v804
      %v819 = vpack.c.b16 %v807, %v806
      %v820 = vpack.c.b16 %v809, %v808
      %v821 = vpack.c.b16 %v811, %v810
      %v822 = vpack.c.b16 %v813, %v812
      %v823 = vpack.c.b16 %v815, %v814
      %832 = vmatpush.bf16.msra.mxu0 %v823
      %833 = vmatpush.bf16.msra.mxu0 %v822
      %834 = vmatpush.bf16.msra.mxu0 %v821
      %835 = vmatpush.bf16.msra.mxu0 %v820
      %836 = vmatpush.bf16.msra.mxu0 %v819
      %837 = vmatpush.bf16.msra.mxu0 %v818
      %838 = vmatpush.bf16.msra.mxu0 %v817
      %839 = vmatpush.bf16.msra.mxu0 %v816
      %840 = vmatmul.bf16.gmra.mxu0 %v763
      %v841 = vpop.f32.mrf.mxu0
      %v842 = vadd.f32 %v782, %v841
      %v843 = vpop.f32.mrf.mxu0
      %v844 = vadd.f32 %v782, %v843
      %845 = vdwg.mxu0
      %v846 = vmax.f32 %v842, 0.0
      %v847 = vmax.f32 %v844, 0.0
      %v848 = vpack.c.bf16 %v847, %v846
      %v849 = vld [vmem:[#allocation9] sm:$0xf]
      %v850 = vld [vmem:[#allocation9 + $0x4] sm:$0xf]
      %v851 = vld [vmem:[#allocation9 + $0x8] sm:$0xf]
      %v852 = vld [vmem:[#allocation9 + $0xc] sm:$0xf]
      %v853 = vld [vmem:[#allocation9 + $0x10] sm:$0xf]
      %v854 = vld [vmem:[#allocation9 + $0x14] sm:$0xf]
      %v855 = vld [vmem:[#allocation9 + $0x18] sm:$0xf]
      %v856 = vld [vmem:[#allocation9 + $0x1c] sm:$0xf]
      %v857 = vld [vmem:[#allocation9 + $0x20] sm:$0xf]
      %v858 = vld [vmem:[#allocation9 + $0x24] sm:$0xf]
      %v859 = vld [vmem:[#allocation9 + $0x28] sm:$0xf]
      %v860 = vld [vmem:[#allocation9 + $0x2c] sm:$0xf]
      %v861 = vld [vmem:[#allocation9 + $0x30] sm:$0xf]
      %v862 = vld [vmem:[#allocation9 + $0x34] sm:$0xf]
      %v863 = vld [vmem:[#allocation9 + $0x38] sm:$0xf]
      %v864 = vld [vmem:[#allocation9 + $0x3c] sm:$0xf]
      %v865 = vld [vmem:[%s6] sm:$0x1]
      %v867 = vperm.slane %v865, 0
      %v885 = vunpack.c.l.b16 %v849
      %v886 = vunpack.c.l.b16 %v850
      %v887 = vunpack.c.l.b16 %v851
      %v888 = vunpack.c.l.b16 %v852
      %v889 = vunpack.c.l.b16 %v853
      %v890 = vunpack.c.l.b16 %v854
      %v891 = vunpack.c.l.b16 %v855
      %v892 = vunpack.c.l.b16 %v856
      %v893 = vunpack.c.l.b16 %v857
      %v894 = vunpack.c.l.b16 %v858
      %v895 = vunpack.c.l.b16 %v859
      %v896 = vunpack.c.l.b16 %v860
      %v897 = vunpack.c.l.b16 %v861
      %v898 = vunpack.c.l.b16 %v862
      %v899 = vunpack.c.l.b16 %v863
      %v900 = vunpack.c.l.b16 %v864
      %v901 = vpack.c.b16 %v886, %v885
      %v902 = vpack.c.b16 %v888, %v887
      %v903 = vpack.c.b16 %v890, %v889
      %v904 = vpack.c.b16 %v892, %v891
      %v905 = vpack.c.b16 %v894, %v893
      %v906 = vpack.c.b16 %v896, %v895
      %v907 = vpack.c.b16 %v898, %v897
      %v908 = vpack.c.b16 %v900, %v899
      %917 = vmatpush.bf16.msra.mxu0 %v908
      %918 = vmatpush.bf16.msra.mxu0 %v907
      %919 = vmatpush.bf16.msra.mxu0 %v906
      %920 = vmatpush.bf16.msra.mxu0 %v905
      %921 = vmatpush.bf16.msra.mxu0 %v904
      %922 = vmatpush.bf16.msra.mxu0 %v903
      %923 = vmatpush.bf16.msra.mxu0 %v902
      %924 = vmatpush.bf16.msra.mxu0 %v901
      %925 = vmatmul.bf16.gmra.mxu0 %v848
      %v926 = vpop.f32.mrf.mxu0
      %v927 = vadd.f32 %v867, %v926
      %v928 = vpop.f32.mrf.mxu0
      %v929 = vadd.f32 %v867, %v928
      %930 = vdwg.mxu0
      %931 = vst [vmem:[#allocation11] sm:$0xff] %v927
      %932 = vst [vmem:[#allocation11 + $0x8] sm:$0xff] %v929
    $region53: #{tpu_custom_call.1} parent=1 // pred_fallthru
      _
    // Predicated region
    $region54: #{tpu_custom_call.1} parent=1 // pred_check
      _
    $region55: #{tpu_custom_call.1} parent=1 // pred_check_branch
      %934 = sbr.rel (0) target = $region57
    $region56: #{tpu_custom_call.1} parent=1 // pred_region
      %936 = vsyncadd [#allocation5], 0
      %s937 = sshll.u32 [#allocation11], 4
      %s938 = int_to_ptr.vmem [resolvable:$true] %s937
      %s939 = sshll.u32 %s7, 4
      %s940 = int_to_ptr.hbm [resolvable:$true] %s939
      %945 = dma.vmem_to_hbm [thread:$0]  %s938, 256, %s940, [#allocation5], 128, 128, 8
    $region57: #{tpu_custom_call.1} parent=1 // pred_fallthru
      _
    // Predicated region
    $region58: #{tpu_custom_call.1} parent=1 // pred_check
      _
    $region59: #{tpu_custom_call.1} parent=1 // pred_check_branch
      %947 = sbr.rel (0) target = $region61
    $region60: #{tpu_custom_call.1} parent=1 // pred_region
      %949 = dma.done [#allocation5], 256
    $region61: #{tpu_custom_call.1} parent=1 // pred_fallthru
      _
    %950 = vsyncpa [#allocation4], 1
    %951 = vsyncpa [#allocation7], 1
    %952 = vsyncpa [#allocation10], 1
    %953 = vsyncpa [#allocation5], 1

</llo_original>
